<compile_context>
chip_gen: v7x
topology: tpu7x:2x2x1
jax: 0.10.0
libtpu: 0.0.40
codegen_flags: <defaults>
</compile_context>

<pallas_src>
from functools import lru_cache, partial

import jax
import jax.numpy as jnp
from jax import lax
from jax.experimental import pallas as pl
from jax.experimental.pallas import tpu as pltpu

_SQRT_2 = 1.4142135623730951
_SQRT_2_OVER_PI = 0.7978845608028654


def _gelu(x, approx):
    if approx:
        # tanh approximation -> EUP (separate VLIW slot, ~free under VALU/MXU pressure)
        inner = _SQRT_2_OVER_PI * (x + 0.044715 * x * x * x)
        return 0.5 * x * (1.0 + jnp.tanh(inner))
    # exact erf variant (torch nn.GELU default) -- strict-parity mode
    return 0.5 * x * (1.0 + lax.erf(x / _SQRT_2))


def _layernorm(x, gamma, beta, eps=1e-5):
    # Two-pass (centered) variance: matches torch LayerNorm and avoids the
    # E[x^2]-mu^2 cancellation flagged in the review.  rsqrt -> EUP.
    mu = jnp.mean(x, axis=-1, keepdims=True)
    xc = x - mu
    var = jnp.mean(xc * xc, axis=-1, keepdims=True)
    return xc * lax.rsqrt(var + eps) * gamma + beta


def _mlp_res_kernel(x_ref, w_in_ref, w1_ref, w2_ref, vec_ref, head_ref,
                    o_ref, h_ref, *, gelu_approx: bool):
    l = pl.program_id(1)
    cdt = w_in_ref.dtype         # MXU operand dtype (bf16 default / f32 parity)
    f32 = jnp.float32

    # --- first res-block step only: input projection  (bm,Cin)@(Cin,H)+b_in -> carried h
    @pl.when(l == 0)
    def _():
        h_ref[...] = (jnp.dot(x_ref[...].astype(cdt), w_in_ref[...],
                              preferred_element_type=f32) + head_ref[0:1, :])

    # --- one LinearResBlock per grid step along the innermost L axis
    h = h_ref[...]
    v = vec_ref[0]                              # (8, H): b1, g1, be1, b2, g2, be2, 0, 0
    t = jnp.dot(h.astype(cdt), w1_ref[0], preferred_element_type=f32) + v[0:1]
    t = _gelu(_layernorm(t, v[1:2], v[2:3]), gelu_approx)
    t = jnp.dot(t.astype(cdt), w2_ref[0], preferred_element_type=f32) + v[3:4]
    t = t + h                                   # residual
    h_new = _gelu(_layernorm(t, v[4:5], v[5:6]), gelu_approx)
    h_ref[...] = h_new

    # --- last step only: Dropout(p=0, eval) = identity, then 1-wide projection.
    # Lane-dense store: one (1, bm) row (batch on lanes) instead of a (bm, 1) column.
    @pl.when(l == pl.num_programs(1) - 1)
    def _():
        yt = lax.dot_general(head_ref[1:2, :], h_new,
                             dimension_numbers=(((1,), (1,)), ((), ())),
                             preferred_element_type=f32)           # (1, bm)
        y = yt + head_ref[2:3, 0:1]
        o_ref[...] = y.reshape(o_ref.shape).astype(o_ref.dtype)


def _round_up(x, m):
    return (x + m - 1) // m * m


@lru_cache(maxsize=None)
def _vmem_capacity_bytes():
    # Trace-time hardware query, cached once; conservative (v7x-sized) fallback.
    try:
        return int(pltpu.get_tpu_info().vmem_capacity_bytes)
    except Exception:
        return 64 << 20


def mlp_res_regressor(x, params, *, bm=256, mxu_dtype=jnp.bfloat16, gelu_approx=True):
    """x: (B, in_channels) float32; params: dict from init_params.

    Defaults are the fast path (bf16 MXU operands, tanh GELU).  For strict parity with
    the PyTorch forward pass use mxu_dtype=jnp.float32, gelu_approx=False.
    """
    B, Cin = x.shape
    H = params["b_in"].shape[0]
    L = params["w1"].shape[0]
    assert params["w_in"].shape == (H, Cin)
    assert L >= 1, "MLPResRegressor with len(sizes) >= 2 (at least one LinearResBlock)"

    # Row tile: big enough to fill the MXU M dim and amortize per-step overhead, but
    #  (a) the batch grid keeps >= 2 tiles when B > 8 (v7x 2-TC sharding, DMA pipelining)
    #  (b) live activations (~several bm*H f32 tiles) stay a small slice of VMEM.
    act_cap = 256 if H <= 384 else 128
    bm = min(bm, act_cap, _round_up(pl.cdiv(B, 2), 8))
    bm = max(8, (bm // 8) * 8)
    B_pad = _round_up(B, bm)
    n_tiles = B_pad // bm
    if B_pad != B:
        # Zero-padded rows flow through LN with var=0 -> rsqrt(eps) stays finite; the
        # padded outputs are sliced off below.
        x = jnp.pad(x, ((0, B_pad - B), (0, 0)))

    # Weights pre-transposed to (in, out) so every hot dot is x @ W; bf16 by default
    # halves weight VMEM + HBM traffic and is the native MXU operand on v5e/v6e/v7x.
    w_in = params["w_in"].T.astype(mxu_dtype)                    # (Cin, H)
    w1 = jnp.swapaxes(params["w1"], -1, -2).astype(mxu_dtype)    # (L, H, H)
    w2 = jnp.swapaxes(params["w2"], -1, -2).astype(mxu_dtype)    # (L, H, H)

    # Six per-block (H,) vectors packed into one (L, 8, H) array (1 DMA per layer).
    vecs = jnp.stack([params["b1"], params["g1"], params["be1"],
                      params["b2"], params["g2"], params["be2"]], axis=1)
    vecs = jnp.pad(vecs, ((0, 0), (0, 2), (0, 0))).astype(jnp.float32)

    # Input bias / projection weight / projection bias packed into one (8, H) array.
    head = jnp.zeros((8, H), jnp.float32)
    head = head.at[0].set(params["b_in"].astype(jnp.float32))
    head = head.at[1].set(params["w_proj"][0].astype(jnp.float32))
    head = head.at[2, 0].set(params["b_proj"][0].astype(jnp.float32))

    grid = (n_tiles, L)   # batch tiles (parallel) x res-blocks (arbitrary, innermost)

    in_specs = [
        pl.BlockSpec((bm, Cin), lambda i, l: (i, 0)),      # x rows (resident across l)
        pl.BlockSpec((Cin, H), lambda i, l: (0, 0)),       # W_in (constant)
        pl.BlockSpec((1, H, H), lambda i, l: (l, 0, 0)),   # W1[l]  streamed per layer
        pl.BlockSpec((1, H, H), lambda i, l: (l, 0, 0)),   # W2[l]  streamed per layer
        pl.BlockSpec((1, 8, H), lambda i, l: (l, 0, 0)),   # packed b/gamma/beta[l]
        pl.BlockSpec((8, H), lambda i, l: (0, 0)),         # packed b_in/w_proj/b_proj
    ]
    # Lane-dense output: last block dim == full array dim bm (unmasked vst).
    out_spec = pl.BlockSpec((1, 1, bm), lambda i, l: (i, 0, 0))

    itemsize = jnp.dtype(mxu_dtype).itemsize
    needed = (2 * (2 * H * H * itemsize + 8 * H * 4)   # double-buffered streamed layer
              + 2 * (Cin * H * itemsize + 8 * H * 4)   # constants (W_in, head)
              + 2 * (bm * Cin * 4 + bm * 4)            # x / out blocks
              + bm * H * 4                             # carried h scratch
              + 8 * bm * H * 4)                        # live elementwise intermediates
    vmem_limit = int(min(max(2 * needed, 32 << 20), (3 * _vmem_capacity_bytes()) // 4))

    out = pl.pallas_call(
        partial(_mlp_res_kernel, gelu_approx=gelu_approx),
        out_shape=jax.ShapeDtypeStruct((n_tiles, 1, bm), x.dtype),
        grid_spec=pltpu.PrefetchScalarGridSpec(
            num_scalar_prefetch=0,
            grid=grid,
            in_specs=in_specs,
            out_specs=out_spec,
            scratch_shapes=[pltpu.VMEM((bm, H), jnp.float32)],   # carried hidden state
        ),
        compiler_params=pltpu.CompilerParams(
            dimension_semantics=("parallel", "arbitrary"),
            vmem_limit_bytes=vmem_limit),
    )(x, w_in, w1, w2, vecs, head)

    return out.reshape(B_pad, 1)[:B]


def init_params(key, in_channels, sizes):
    """Deterministic synthetic parameters matching the PyTorch module shapes."""
    assert len(sizes) >= 2 and all(s == sizes[0] for s in sizes), \
        "LinearResBlock chain requires a uniform hidden width"
    H, L = sizes[0], len(sizes) - 1
    ks = iter(jax.random.split(key, 4 + 8 * L))

    def uniform(k, shape, fan_in):
        bound = 1.0 / float(fan_in) ** 0.5
        return jax.random.uniform(k, shape, jnp.float32, -bound, bound)

    p = {
        "w_in": uniform(next(ks), (H, in_channels), in_channels),   # nn.Linear (out, in)
        "b_in": uniform(next(ks), (H,), in_channels),
        "w_proj": uniform(next(ks), (1, H), H),
        "b_proj": uniform(next(ks), (1,), H),
    }
    blk = {k: [] for k in ("w1", "b1", "g1", "be1", "w2", "b2", "g2", "be2")}
    for _ in range(L):
        blk["w1"].append(uniform(next(ks), (H, H), H))
        blk["b1"].append(uniform(next(ks), (H,), H))
        blk["w2"].append(uniform(next(ks), (H, H), H))
        blk["b2"].append(uniform(next(ks), (H,), H))
        # LayerNorm affine params (torch default is ones/zeros; perturb so the
        # correctness check actually exercises the affine transform).
        blk["g1"].append(1.0 + 0.1 * jax.random.normal(next(ks), (H,), jnp.float32))
        blk["be1"].append(0.1 * jax.random.normal(next(ks), (H,), jnp.float32))
        blk["g2"].append(1.0 + 0.1 * jax.random.normal(next(ks), (H,), jnp.float32))
        blk["be2"].append(0.1 * jax.random.normal(next(ks), (H,), jnp.float32))
    for k, v in blk.items():
        p[k] = jnp.stack(v, axis=0)
    return p


def reference(x, p):
    """Pure-JAX mirror of MLPResRegressor.forward (two-pass LN, exact GELU)."""
    def ln(v, g, b, eps=1e-5):
        mu = jnp.mean(v, axis=-1, keepdims=True)
        var = jnp.mean((v - mu) ** 2, axis=-1, keepdims=True)
        return (v - mu) / jnp.sqrt(var + eps) * g + b

    def gelu(v):
        return 0.5 * v * (1.0 + lax.erf(v / _SQRT_2))

    h = x @ p["w_in"].T + p["b_in"]
    for l in range(p["w1"].shape[0]):
        t = h @ p["w1"][l].T + p["b1"][l]
        t = gelu(ln(t, p["g1"][l], p["be1"][l]))
        t = t @ p["w2"][l].T + p["b2"][l]
        t = t + h
        h = gelu(ln(t, p["g2"][l], p["be2"][l]))
    return h @ p["w_proj"].T + p["b_proj"]


if __name__ == "__main__":
    key = jax.random.PRNGKey(0)
    kx, kp = jax.random.split(key)

    B, Cin = 16, 32
    sizes = [128, 128, 128]     # lane-dense hidden width, 2 res blocks (small demo)
    x = jax.random.normal(kx, (B, Cin), jnp.float32)
    params = init_params(kp, Cin, sizes)

    ref = reference(x, params)

    # Strict-parity path: f32 MXU operands + exact erf GELU.
    out_exact = jax.block_until_ready(
        mlp_res_regressor(x, params, mxu_dtype=jnp.float32, gelu_approx=False))
    assert out_exact.shape == (B, 1)
    assert jnp.allclose(out_exact, ref, atol=1e-3, rtol=1e-3), (
        f"f32 max abs err {jnp.max(jnp.abs(out_exact - ref))}")

    # Default fast path: bf16 MXU operands + tanh GELU (looser tolerance).
    out_fast = jax.block_until_ready(mlp_res_regressor(x, params))
    assert out_fast.shape == (B, 1)
    assert bool(jnp.all(jnp.isfinite(out_fast)))
    assert jnp.allclose(out_fast, ref, atol=2.5e-1, rtol=1e-1), (
        f"bf16/tanh max abs err {jnp.max(jnp.abs(out_fast - ref))}")

    print("KERNEL_OK")
</pallas_src>

<mosaic_0001>
module attributes {stable_mosaic.version = 11 : i64} {
  func.func @_mlp_res_kernel(%arg0: i32, %arg1: i32, %arg2: memref<8x32xf32, #tpu.memory_space<vmem>>, %arg3: memref<32x128xf32, #tpu.memory_space<vmem>>, %arg4: memref<1x128x128xf32, #tpu.memory_space<vmem>>, %arg5: memref<1x128x128xf32, #tpu.memory_space<vmem>>, %arg6: memref<1x8x128xf32, #tpu.memory_space<vmem>>, %arg7: memref<8x128xf32, #tpu.memory_space<vmem>>, %arg8: memref<1x1x8xf32, #tpu.memory_space<vmem>>, %arg9: memref<8x128xf32, #tpu.memory_space<vmem>>) attributes {dimension_semantics = [#tpu.dimension_semantics<parallel>, #tpu.dimension_semantics<arbitrary>], iteration_bounds = array<i64: 2, 2>, scalar_prefetch = 0 : i64, scratch_operands = 1 : i64, tpu.core_type = #tpu.core_type<tc>, window_params = [{transform_indices = @transform_0, window_bounds = array<i64: 8, 32>}, {pipeline_mode = #tpu.pipeline_mode<synchronous>, transform_indices = @transform_1, window_bounds = array<i64: 32, 128>}, {transform_indices = @transform_2, window_bounds = array<i64: 1, 128, 128>}, {transform_indices = @transform_3, window_bounds = array<i64: 1, 128, 128>}, {transform_indices = @transform_4, window_bounds = array<i64: 1, 8, 128>}, {pipeline_mode = #tpu.pipeline_mode<synchronous>, transform_indices = @transform_5, window_bounds = array<i64: 8, 128>}, {transform_indices = @transform_6, window_bounds = array<i64: 1, 1, 8>}]} {
    %c0_i32 = arith.constant 0 : i32
    %0 = arith.cmpi eq, %arg1, %c0_i32 : i32
    %1 = arith.extui %0 : i1 to i32
    %c0_i32_0 = arith.constant 0 : i32
    %2 = arith.cmpi ne, %1, %c0_i32_0 : i32
    scf.if %2 {
      %c0_31 = arith.constant 0 : index
      %c0_32 = arith.constant 0 : index
      %83 = vector.load %arg2[%c0_31, %c0_32] : memref<8x32xf32, #tpu.memory_space<vmem>>, vector<8x32xf32>
      %c0_33 = arith.constant 0 : index
      %c0_34 = arith.constant 0 : index
      %84 = vector.load %arg3[%c0_33, %c0_34] : memref<32x128xf32, #tpu.memory_space<vmem>>, vector<32x128xf32>
      %cst_35 = arith.constant dense<0.000000e+00> : vector<8x128xf32>
      %85 = tpu.matmul %83, %84, %cst_35 {dimension_numbers = #tpu.dot_dimension_numbers<[1], [0], [0], [1], [0, 0, 1, 1], [], []>} : vector<8x32xf32>, vector<32x128xf32>, vector<8x128xf32> -> vector<8x128xf32>
      %c0_36 = arith.constant 0 : index
      %c0_37 = arith.constant 0 : index
      %86 = vector.load %arg7[%c0_36, %c0_37] : memref<8x128xf32, #tpu.memory_space<vmem>>, vector<1x128xf32>
      %87 = vector.broadcast %86 : vector<1x128xf32> to vector<8x128xf32>
      %88 = arith.addf %85, %87 : vector<8x128xf32>
      %c0_38 = arith.constant 0 : index
      %c0_39 = arith.constant 0 : index
      %89 = vector.load %arg9[%c0_38, %c0_39] : memref<8x128xf32, #tpu.memory_space<vmem>>, vector<8x128xf32>
      tpu.vector_store %arg9[%c0_38, %c0_39], %88 {strides = array<i32>} : memref<8x128xf32, #tpu.memory_space<vmem>>, vector<8x128xf32>,
    } else {
    }
    %c0 = arith.constant 0 : index
    %c0_1 = arith.constant 0 : index
    %3 = vector.load %arg9[%c0, %c0_1] : memref<8x128xf32, #tpu.memory_space<vmem>>, vector<8x128xf32>
    %c0_2 = arith.constant 0 : index
    %c0_3 = arith.constant 0 : index
    %c0_4 = arith.constant 0 : index
    %4 = vector.load %arg6[%c0_2, %c0_3, %c0_4] : memref<1x8x128xf32, #tpu.memory_space<vmem>>, vector<1x8x128xf32>
    %5 = vector.shape_cast %4 : vector<1x8x128xf32> to vector<8x128xf32>
    %c0_5 = arith.constant 0 : index
    %c0_6 = arith.constant 0 : index
    %c0_7 = arith.constant 0 : index
    %6 = vector.load %arg4[%c0_5, %c0_6, %c0_7] : memref<1x128x128xf32, #tpu.memory_space<vmem>>, vector<1x128x128xf32>
    %7 = vector.shape_cast %6 : vector<1x128x128xf32> to vector<128x128xf32>
    %cst = arith.constant dense<0.000000e+00> : vector<8x128xf32>
    %8 = tpu.matmul %3, %7, %cst {dimension_numbers = #tpu.dot_dimension_numbers<[1], [0], [0], [1], [0, 0, 1, 1], [], []>} : vector<8x128xf32>, vector<128x128xf32>, vector<8x128xf32> -> vector<8x128xf32>
    %9 = vector.extract_strided_slice %5 {offsets = [0, 0], sizes = [1, 128], strides = [1, 1]} : vector<8x128xf32> to vector<1x128xf32>
    %10 = vector.broadcast %9 : vector<1x128xf32> to vector<8x128xf32>
    %11 = arith.addf %8, %10 : vector<8x128xf32>
    %12 = vector.extract_strided_slice %5 {offsets = [1, 0], sizes = [1, 128], strides = [1, 1]} : vector<8x128xf32> to vector<1x128xf32>
    %13 = vector.extract_strided_slice %5 {offsets = [2, 0], sizes = [1, 128], strides = [1, 1]} : vector<8x128xf32> to vector<1x128xf32>
    %cst_8 = arith.constant dense<0.000000e+00> : vector<8xf32>
    %14 = vector.multi_reduction <add>, %11, %cst_8 [1] : vector<8x128xf32> to vector<8xf32>
    %15 = vector.shape_cast %14 : vector<8xf32> to vector<8x1xf32>
    %cst_9 = arith.constant 1.280000e+02 : f32
    %16 = vector.broadcast %cst_9 : f32 to vector<8x1xf32>
    %17 = arith.divf %15, %16 : vector<8x1xf32>
    %18 = vector.broadcast %17 : vector<8x1xf32> to vector<8x128xf32>
    %19 = arith.subf %11, %18 : vector<8x128xf32>
    %20 = arith.mulf %19, %19 : vector<8x128xf32>
    %cst_10 = arith.constant dense<0.000000e+00> : vector<8xf32>
    %21 = vector.multi_reduction <add>, %20, %cst_10 [1] : vector<8x128xf32> to vector<8xf32>
    %22 = vector.shape_cast %21 : vector<8xf32> to vector<8x1xf32>
    %cst_11 = arith.constant 1.280000e+02 : f32
    %23 = vector.broadcast %cst_11 : f32 to vector<8x1xf32>
    %24 = arith.divf %22, %23 : vector<8x1xf32>
    %cst_12 = arith.constant 9.99999974E-6 : f32
    %25 = vector.broadcast %cst_12 : f32 to vector<8x1xf32>
    %26 = arith.addf %24, %25 : vector<8x1xf32>
    %27 = math.rsqrt %26 : vector<8x1xf32>
    %28 = vector.broadcast %27 : vector<8x1xf32> to vector<8x128xf32>
    %29 = arith.mulf %19, %28 : vector<8x128xf32>
    %30 = vector.broadcast %12 : vector<1x128xf32> to vector<8x128xf32>
    %31 = arith.mulf %29, %30 : vector<8x128xf32>
    %32 = vector.broadcast %13 : vector<1x128xf32> to vector<8x128xf32>
    %33 = arith.addf %31, %32 : vector<8x128xf32>
    %cst_13 = arith.constant 5.000000e-01 : f32
    %34 = vector.broadcast %cst_13 : f32 to vector<8x128xf32>
    %35 = arith.mulf %34, %33 : vector<8x128xf32>
    %cst_14 = arith.constant 1.41421354 : f32
    %36 = vector.broadcast %cst_14 : f32 to vector<8x128xf32>
    %37 = arith.divf %33, %36 : vector<8x128xf32>
    %38 = math.erf %37 : vector<8x128xf32>
    %cst_15 = arith.constant 1.000000e+00 : f32
    %39 = vector.broadcast %cst_15 : f32 to vector<8x128xf32>
    %40 = arith.addf %39, %38 : vector<8x128xf32>
    %41 = arith.mulf %35, %40 : vector<8x128xf32>
    %c0_16 = arith.constant 0 : index
    %c0_17 = arith.constant 0 : index
    %c0_18 = arith.constant 0 : index
    %42 = vector.load %arg5[%c0_16, %c0_17, %c0_18] : memref<1x128x128xf32, #tpu.memory_space<vmem>>, vector<1x128x128xf32>
    %43 = vector.shape_cast %42 : vector<1x128x128xf32> to vector<128x128xf32>
    %cst_19 = arith.constant dense<0.000000e+00> : vector<8x128xf32>
    %44 = tpu.matmul %41, %43, %cst_19 {dimension_numbers = #tpu.dot_dimension_numbers<[1], [0], [0], [1], [0, 0, 1, 1], [], []>} : vector<8x128xf32>, vector<128x128xf32>, vector<8x128xf32> -> vector<8x128xf32>
    %45 = vector.extract_strided_slice %5 {offsets = [3, 0], sizes = [1, 128], strides = [1, 1]} : vector<8x128xf32> to vector<1x128xf32>
    %46 = vector.broadcast %45 : vector<1x128xf32> to vector<8x128xf32>
    %47 = arith.addf %44, %46 : vector<8x128xf32>
    %48 = arith.addf %47, %3 : vector<8x128xf32>
    %49 = vector.extract_strided_slice %5 {offsets = [4, 0], sizes = [1, 128], strides = [1, 1]} : vector<8x128xf32> to vector<1x128xf32>
    %50 = vector.extract_strided_slice %5 {offsets = [5, 0], sizes = [1, 128], strides = [1, 1]} : vector<8x128xf32> to vector<1x128xf32>
    %cst_20 = arith.constant dense<0.000000e+00> : vector<8xf32>
    %51 = vector.multi_reduction <add>, %48, %cst_20 [1] : vector<8x128xf32> to vector<8xf32>
    %52 = vector.shape_cast %51 : vector<8xf32> to vector<8x1xf32>
    %cst_21 = arith.constant 1.280000e+02 : f32
    %53 = vector.broadcast %cst_21 : f32 to vector<8x1xf32>
    %54 = arith.divf %52, %53 : vector<8x1xf32>
    %55 = vector.broadcast %54 : vector<8x1xf32> to vector<8x128xf32>
    %56 = arith.subf %48, %55 : vector<8x128xf32>
    %57 = arith.mulf %56, %56 : vector<8x128xf32>
    %cst_22 = arith.constant dense<0.000000e+00> : vector<8xf32>
    %58 = vector.multi_reduction <add>, %57, %cst_22 [1] : vector<8x128xf32> to vector<8xf32>
    %59 = vector.shape_cast %58 : vector<8xf32> to vector<8x1xf32>
    %cst_23 = arith.constant 1.280000e+02 : f32
    %60 = vector.broadcast %cst_23 : f32 to vector<8x1xf32>
    %61 = arith.divf %59, %60 : vector<8x1xf32>
    %cst_24 = arith.constant 9.99999974E-6 : f32
    %62 = vector.broadcast %cst_24 : f32 to vector<8x1xf32>
    %63 = arith.addf %61, %62 : vector<8x1xf32>
    %64 = math.rsqrt %63 : vector<8x1xf32>
    %65 = vector.broadcast %64 : vector<8x1xf32> to vector<8x128xf32>
    %66 = arith.mulf %56, %65 : vector<8x128xf32>
    %67 = vector.broadcast %49 : vector<1x128xf32> to vector<8x128xf32>
    %68 = arith.mulf %66, %67 : vector<8x128xf32>
    %69 = vector.broadcast %50 : vector<1x128xf32> to vector<8x128xf32>
    %70 = arith.addf %68, %69 : vector<8x128xf32>
    %cst_25 = arith.constant 5.000000e-01 : f32
    %71 = vector.broadcast %cst_25 : f32 to vector<8x128xf32>
    %72 = arith.mulf %71, %70 : vector<8x128xf32>
    %cst_26 = arith.constant 1.41421354 : f32
    %73 = vector.broadcast %cst_26 : f32 to vector<8x128xf32>
    %74 = arith.divf %70, %73 : vector<8x128xf32>
    %75 = math.erf %74 : vector<8x128xf32>
    %cst_27 = arith.constant 1.000000e+00 : f32
    %76 = vector.broadcast %cst_27 : f32 to vector<8x128xf32>
    %77 = arith.addf %76, %75 : vector<8x128xf32>
    %78 = arith.mulf %72, %77 : vector<8x128xf32>
    %c0_28 = arith.constant 0 : index
    %c0_29 = arith.constant 0 : index
    %79 = vector.load %arg9[%c0_28, %c0_29] : memref<8x128xf32, #tpu.memory_space<vmem>>, vector<8x128xf32>
    tpu.vector_store %arg9[%c0_28, %c0_29], %78 {strides = array<i32>} : memref<8x128xf32, #tpu.memory_space<vmem>>, vector<8x128xf32>,
    %c1_i32 = arith.constant 1 : i32
    %80 = arith.cmpi eq, %arg1, %c1_i32 : i32
    %81 = arith.extui %80 : i1 to i32
    %c0_i32_30 = arith.constant 0 : i32
    %82 = arith.cmpi ne, %81, %c0_i32_30 : i32
    scf.if %82 {
      %c1 = arith.constant 1 : index
      %c0_31 = arith.constant 0 : index
      %83 = vector.load %arg7[%c1, %c0_31] : memref<8x128xf32, #tpu.memory_space<vmem>>, vector<1x128xf32>
      %cst_32 = arith.constant dense<0.000000e+00> : vector<1x8xf32>
      %84 = tpu.matmul %83, %78, %cst_32 {dimension_numbers = #tpu.dot_dimension_numbers<[1], [1], [0], [0], [0, 0, 1, 0], [], []>} : vector<1x128xf32>, vector<8x128xf32>, vector<1x8xf32> -> vector<1x8xf32>
      %c2 = arith.constant 2 : index
      %c0_33 = arith.constant 0 : index
      %85 = vector.load %arg7[%c2, %c0_33] : memref<8x128xf32, #tpu.memory_space<vmem>>, vector<1x1xf32>
      %86 = vector.broadcast %85 : vector<1x1xf32> to vector<1x8xf32>
      %87 = arith.addf %84, %86 : vector<1x8xf32>
      %88 = vector.shape_cast %87 : vector<1x8xf32> to vector<1x1x8xf32>
      %c0_34 = arith.constant 0 : index
      %c0_35 = arith.constant 0 : index
      %c0_36 = arith.constant 0 : index
      %89 = vector.load %arg8[%c0_34, %c0_35, %c0_36] : memref<1x1x8xf32, #tpu.memory_space<vmem>>, vector<1x1x8xf32>
      tpu.vector_store %arg8[%c0_34, %c0_35, %c0_36], %88 {strides = array<i32>} : memref<1x1x8xf32, #tpu.memory_space<vmem>>, vector<1x1x8xf32>,
    } else {
    }
    return
  }
  func.func @transform_0(%arg0: i32, %arg1: i32) -> (i32, i32) {
    %c0_i32 = arith.constant 0 : i32
    %c0_i32_0 = arith.constant 0 : i32
    return %arg0, %c0_i32 : i32, i32
  }
  func.func @transform_1(%arg0: i32, %arg1: i32) -> (i32, i32) {
    %c0_i32 = arith.constant 0 : i32
    %c0_i32_0 = arith.constant 0 : i32
    %c0_i32_1 = arith.constant 0 : i32
    return %c0_i32, %c0_i32_0 : i32, i32
  }
  func.func @transform_2(%arg0: i32, %arg1: i32) -> (i32, i32, i32) {
    %c0_i32 = arith.constant 0 : i32
    %c0_i32_0 = arith.constant 0 : i32
    %c0_i32_1 = arith.constant 0 : i32
    return %arg1, %c0_i32, %c0_i32_0 : i32, i32, i32
  }
  func.func @transform_3(%arg0: i32, %arg1: i32) -> (i32, i32, i32) {
    %c0_i32 = arith.constant 0 : i32
    %c0_i32_0 = arith.constant 0 : i32
    %c0_i32_1 = arith.constant 0 : i32
    return %arg1, %c0_i32, %c0_i32_0 : i32, i32, i32
  }
  func.func @transform_4(%arg0: i32, %arg1: i32) -> (i32, i32, i32) {
    %c0_i32 = arith.constant 0 : i32
    %c0_i32_0 = arith.constant 0 : i32
    %c0_i32_1 = arith.constant 0 : i32
    return %arg1, %c0_i32, %c0_i32_0 : i32, i32, i32
  }
  func.func @transform_5(%arg0: i32, %arg1: i32) -> (i32, i32) {
    %c0_i32 = arith.constant 0 : i32
    %c0_i32_0 = arith.constant 0 : i32
    %c0_i32_1 = arith.constant 0 : i32
    return %c0_i32, %c0_i32_0 : i32, i32
  }
  func.func @transform_6(%arg0: i32, %arg1: i32) -> (i32, i32, i32) {
    %c0_i32 = arith.constant 0 : i32
    %c0_i32_0 = arith.constant 0 : i32
    %c0_i32_1 = arith.constant 0 : i32
    return %arg0, %c0_i32, %c0_i32_0 : i32, i32, i32
  }
}

</mosaic_0001>

<llo_original>
// kernel: tpu_custom_call.1
$region0: #{tpu_custom_call.1}
  #allocation0 [shape = 'u32[]', space=smem, size = 0x4, offset = 0x4, fixed_abs, tag = 'smem constant byte address 0x4 - core index']
  #allocation1 [shape = 'u32[144,128]{1,0:T(1,128)}', space=vmem, size = 0x12000, scoped, tag = 'internal scratch']
  #allocation2 [shape = 'f32[8,128]{1,0:T(8,128)}', space=vmem, size = 0x1000, scoped, tag = 'scratch operand']
  %s0 = inlined_call_operand.hbm [shape: f32[16,32], index: 0, kind: input, shape index: {}]
  %s1 = inlined_call_operand.hbm [shape: f32[32,128], index: 1, kind: input, shape index: {}]
  %s2 = inlined_call_operand.hbm [shape: f32[2,128,128], index: 2, kind: input, shape index: {}]
  %s3 = inlined_call_operand.hbm [shape: f32[2,128,128], index: 3, kind: input, shape index: {}]
  %s4 = inlined_call_operand.hbm [shape: f32[2,8,128], index: 4, kind: input, shape index: {}]
  %s5 = inlined_call_operand.vmem [shape: f32[8,128], index: 5, kind: input, shape index: {}]
  %s6 = inlined_call_operand.hbm [shape: f32[2,1,8], index: 6, kind: output, shape index: {}]
  %s7 = sld [smem:[#allocation0]]
  $region85: #{tpu_custom_call.1} parent=0
    _
  %s9 = ssub.s32 1, %s7
  %s10 = scalar_select 0, %s9, %s7
  $region1: #{tpu_custom_call.1} parent=0
    #allocation3 [shape = 'u8[8192]{0}', space=vmem, size = 0x2000, scoped, tag = 'input window, operand 0']
    #allocation4 [shape = 's32[2]{0}', space=sflag, size = 0x8, scoped, tag = 'scoped memory for tpu_custom_call.1']
    #allocation5 [shape = 's32[2]{0}', space=sflag, size = 0x8, scoped, tag = 'scoped memory for tpu_custom_call.1']
    #allocation6 [shape = 'u8[16384]{0}', space=vmem, size = 0x4000, scoped, tag = 'input window, operand 1, single buffered']
    #allocation7 [shape = 's32[1]{0}', space=sflag, size = 0x4, scoped, tag = 'scoped memory for tpu_custom_call.1']
    #allocation8 [shape = 'u8[131072]{0}', space=vmem, size = 0x20000, scoped, tag = 'input window, operand 2']
    #allocation9 [shape = 'u8[131072]{0}', space=vmem, size = 0x20000, scoped, tag = 'input window, operand 3']
    #allocation10 [shape = 'u8[8192]{0}', space=vmem, size = 0x2000, scoped, tag = 'input window, operand 4']
    #allocation11 [shape = 'u8[1024]{0}', space=vmem, size = 0x400, scoped, tag = 'output window, operand 0']
    %11 = vsyncpa [#allocation4], 0
    %s12 = scalar_lea.sflag [#allocation4], 1
    %13 = vsyncpa %s12, 0
    %14 = vsyncpa [#allocation7], 0
    %15 = vsyncpa [#allocation5], 0
    %s16 = scalar_lea.sflag [#allocation5], 1
    %17 = vsyncpa %s16, 0
    loop: start=0, step=1, limit=6
    $region2: #{tpu_custom_call.1} parent=1 // loop_pre_header
      _
    $region3: #{tpu_custom_call.1} parent=1 // loop_header
      %s19 = sphi 0, %s23
      %p20 = scmp.ge.s32.totalorder %s19, 6
      %s26 = sphi 0, %s38
      %s27 = sphi 0, %s34
      %s28 = sphi 0, %s26
      %s29 = sphi 0, %s27
      %s30 = sphi 0, %s28
      %s31 = sphi 0, %s29
      %s41 = sphi 0, %s43
      %s44 = sphi 0, %s41
      %s45 = sphi 0, %s44
      %s61 = sphi 0, %s45
      %s65 = sphi 0, %s65
      %s67 = sphi 0, %s65
      %s68 = sphi 0, %s67
      %s82 = sphi 0, %s68
      %s88 = sphi 0, %s90
      %s91 = sphi 0, %s88
      %s92 = sphi 0, %s91
      %s108 = sphi 0, %s92
      %s114 = sphi 0, %s116
      %s117 = sphi 0, %s114
      %s118 = sphi 0, %s117
      %s134 = sphi 0, %s118
      %s140 = sphi 0, %s142
      %s143 = sphi 0, %s140
      %s144 = sphi 0, %s143
      %s160 = sphi 0, %s144
      %s164 = sphi 0, %s164
      %s166 = sphi 0, %s164
      %s167 = sphi 0, %s166
      %s181 = sphi 0, %s167
      %s187 = sphi 0, %s189
      %s190 = sphi 0, %s187
      %s191 = sphi 0, %s190
      %s207 = sphi 0, %s191
    $region4: #{tpu_custom_call.1} parent=1 // loop_header_branch
      %22 = sbr.rel (%p20) target = $region8
    $region5: #{tpu_custom_call.1} parent=1 // loop_body
      %s24 = ssub.s32 %s19, 1
      %s25 = ssub.s32 %s19, 2
      %s32 = sadd.s32 1, %s27
      %p33 = scmp.ge.s32.totalorder %s32, 2
      %s34 = scalar_select %p33, 0, %s32
      %s35 = sadd.s32 1, %s26
      %s36 = scalar_select %p33, %s35, %s26
      %p37 = scmp.ge.s32.totalorder %s36, 2
      %s38 = scalar_select %p37, 0, %s36
      %s39 = ssub.s32 %s26, %s38
      %p40 = scmp.eq.s32.totalorder %s39, 0
      %s42 = sadd.s32 %s41, 1
      %s43 = scalar_select %p40, %s41, %s42
      %p46 = pneg %p40
      %p47 = scmp.eq.s32.totalorder %s19, 3
      %p48 = por %p46, %p47
      %p49 = scmp.ne.s32.totalorder %s41, %s44
      %p50 = scmp.eq.s32.totalorder %s19, 0
      %p51 = por %p49, %p50
      %p52 = scmp.ne.s32.totalorder %s41, %s44
      %p53 = scmp.eq.s32.totalorder %s24, 3
      %p54 = por %p52, %p53
      %p55 = scmp.ne.s32.totalorder %s44, %s45
      %p56 = scmp.eq.s32.totalorder %s24, 0
      %p57 = por %p55, %p56
      %p58 = scmp.ne.s32.totalorder %s44, %s45
      %p59 = scmp.eq.s32.totalorder %s25, 3
      %p60 = por %p58, %p59
      %p62 = scmp.ne.s32.totalorder %s45, %s61
      %p63 = scmp.eq.s32.totalorder %s25, 0
      %p64 = por %p62, %p63
      %s66 = sadd.s32 %s65, 1
      %p69 = scmp.eq.s32.totalorder %s19, 3
      %p70 = scmp.ne.s32.totalorder %s65, %s67
      %p71 = scmp.eq.s32.totalorder %s19, 0
      %p72 = por %p70, %p71
      %p73 = scmp.ne.s32.totalorder %s65, %s67
      %p74 = scmp.eq.s32.totalorder %s24, 3
      %p75 = por %p73, %p74
      %p76 = scmp.ne.s32.totalorder %s67, %s68
      %p77 = scmp.eq.s32.totalorder %s24, 0
      %p78 = por %p76, %p77
      %p79 = scmp.ne.s32.totalorder %s67, %s68
      %p80 = scmp.eq.s32.totalorder %s25, 3
      %p81 = por %p79, %p80
      %p83 = scmp.ne.s32.totalorder %s68, %s82
      %p84 = scmp.eq.s32.totalorder %s25, 0
      %p85 = por %p83, %p84
      %s86 = ssub.s32 %s27, %s34
      %p87 = scmp.eq.s32.totalorder %s86, 0
      %s89 = sadd.s32 %s88, 1
      %s90 = scalar_select %p87, %s88, %s89
      %p93 = pneg %p87
      %p94 = scmp.eq.s32.totalorder %s19, 3
      %p95 = por %p93, %p94
      %p96 = scmp.ne.s32.totalorder %s88, %s91
      %p97 = scmp.eq.s32.totalorder %s19, 0
      %p98 = por %p96, %p97
      %p99 = scmp.ne.s32.totalorder %s88, %s91
      %p100 = scmp.eq.s32.totalorder %s24, 3
      %p101 = por %p99, %p100
      %p102 = scmp.ne.s32.totalorder %s91, %s92
      %p103 = scmp.eq.s32.totalorder %s24, 0
      %p104 = por %p102, %p103
      %p105 = scmp.ne.s32.totalorder %s91, %s92
      %p106 = scmp.eq.s32.totalorder %s25, 3
      %p107 = por %p105, %p106
      %p109 = scmp.ne.s32.totalorder %s92, %s108
      %p110 = scmp.eq.s32.totalorder %s25, 0
      %p111 = por %p109, %p110
      %s112 = ssub.s32 %s27, %s34
      %p113 = scmp.eq.s32.totalorder %s112, 0
      %s115 = sadd.s32 %s114, 1
      %s116 = scalar_select %p113, %s114, %s115
      %p119 = pneg %p113
      %p120 = scmp.eq.s32.totalorder %s19, 3
      %p121 = por %p119, %p120
      %p122 = scmp.ne.s32.totalorder %s114, %s117
      %p123 = scmp.eq.s32.totalorder %s19, 0
      %p124 = por %p122, %p123
      %p125 = scmp.ne.s32.totalorder %s114, %s117
      %p126 = scmp.eq.s32.totalorder %s24, 3
      %p127 = por %p125, %p126
      %p128 = scmp.ne.s32.totalorder %s117, %s118
      %p129 = scmp.eq.s32.totalorder %s24, 0
      %p130 = por %p128, %p129
      %p131 = scmp.ne.s32.totalorder %s117, %s118
      %p132 = scmp.eq.s32.totalorder %s25, 3
      %p133 = por %p131, %p132
      %p135 = scmp.ne.s32.totalorder %s118, %s134
      %p136 = scmp.eq.s32.totalorder %s25, 0
      %p137 = por %p135, %p136
      %s138 = ssub.s32 %s27, %s34
      %p139 = scmp.eq.s32.totalorder %s138, 0
      %s141 = sadd.s32 %s140, 1
      %s142 = scalar_select %p139, %s140, %s141
      %p145 = pneg %p139
      %p146 = scmp.eq.s32.totalorder %s19, 3
      %p147 = por %p145, %p146
      %p148 = scmp.ne.s32.totalorder %s140, %s143
      %p149 = scmp.eq.s32.totalorder %s19, 0
      %p150 = por %p148, %p149
      %p151 = scmp.ne.s32.totalorder %s140, %s143
      %p152 = scmp.eq.s32.totalorder %s24, 3
      %p153 = por %p151, %p152
      %p154 = scmp.ne.s32.totalorder %s143, %s144
      %p155 = scmp.eq.s32.totalorder %s24, 0
      %p156 = por %p154, %p155
      %p157 = scmp.ne.s32.totalorder %s143, %s144
      %p158 = scmp.eq.s32.totalorder %s25, 3
      %p159 = por %p157, %p158
      %p161 = scmp.ne.s32.totalorder %s144, %s160
      %p162 = scmp.eq.s32.totalorder %s25, 0
      %p163 = por %p161, %p162
      %s165 = sadd.s32 %s164, 1
      %p168 = scmp.eq.s32.totalorder %s19, 3
      %p169 = scmp.ne.s32.totalorder %s164, %s166
      %p170 = scmp.eq.s32.totalorder %s19, 0
      %p171 = por %p169, %p170
      %p172 = scmp.ne.s32.totalorder %s164, %s166
      %p173 = scmp.eq.s32.totalorder %s24, 3
      %p174 = por %p172, %p173
      %p175 = scmp.ne.s32.totalorder %s166, %s167
      %p176 = scmp.eq.s32.totalorder %s24, 0
      %p177 = por %p175, %p176
      %p178 = scmp.ne.s32.totalorder %s166, %s167
      %p179 = scmp.eq.s32.totalorder %s25, 3
      %p180 = por %p178, %p179
      %p182 = scmp.ne.s32.totalorder %s167, %s181
      %p183 = scmp.eq.s32.totalorder %s25, 0
      %p184 = por %p182, %p183
      %s185 = ssub.s32 %s26, %s38
      %p186 = scmp.eq.s32.totalorder %s185, 0
      %s188 = sadd.s32 %s187, 1
      %s189 = scalar_select %p186, %s187, %s188
      %p192 = pneg %p186
      %p193 = scmp.eq.s32.totalorder %s19, 3
      %p194 = por %p192, %p193
      %p195 = scmp.ne.s32.totalorder %s187, %s190
      %p196 = scmp.eq.s32.totalorder %s19, 0
      %p197 = por %p195, %p196
      %p198 = scmp.ne.s32.totalorder %s187, %s190
      %p199 = scmp.eq.s32.totalorder %s24, 3
      %p200 = por %p198, %p199
      %p201 = scmp.ne.s32.totalorder %s190, %s191
      %p202 = scmp.eq.s32.totalorder %s24, 0
      %p203 = por %p201, %p202
      %p204 = scmp.ne.s32.totalorder %s190, %s191
      %p205 = scmp.eq.s32.totalorder %s25, 3
      %p206 = por %p204, %p205
      %p208 = scmp.ne.s32.totalorder %s191, %s207
      %p209 = scmp.eq.s32.totalorder %s25, 0
      %p210 = por %p208, %p209
      %p211 = scmp.le.s32.totalorder 1, %s19
      %p212 = scmp.lt.s32.totalorder %s19, 5
      %p213 = pnand %p211, %p212
      %p214 = pneg %p213
      // Predicated region
      $region9: #{tpu_custom_call.1} parent=5 // pred_check
        _
      $region10: #{tpu_custom_call.1} parent=5 // pred_check_branch
        %216 = sbr.rel (%p213) target = $region12
      $region11: #{tpu_custom_call.1} parent=5 // pred_region
        %s217 = ssub.s32 %s19, 1
        // Predicated region
        $region13: #{tpu_custom_call.1} parent=11 // pred_check
          %p218 = pneg %p78
        $region14: #{tpu_custom_call.1} parent=11 // pred_check_branch
          %220 = sbr.rel (%p218) target = $region16
        $region15: #{tpu_custom_call.1} parent=11 // pred_region
          %s222 = ssub.s32 512, 512
          %223 = vsyncadd [#allocation7], %s222
          %s224 = sshll.u32 [#allocation6], 4
          %s225 = int_to_ptr.vmem [resolvable:$true] %s224
          %230 = dma.hbm_to_vmem [thread:$0]  %s1, 512, %s225, [#allocation7], 128, 128, 8
        $region16: #{tpu_custom_call.1} parent=11 // pred_fallthru
          _
        // Predicated region
        $region17: #{tpu_custom_call.1} parent=11 // pred_check
          %p231 = pneg %p177
        $region18: #{tpu_custom_call.1} parent=11 // pred_check_branch
          %233 = sbr.rel (%p231) target = $region20
        $region19: #{tpu_custom_call.1} parent=11 // pred_region
          _
        $region20: #{tpu_custom_call.1} parent=11 // pred_fallthru
          _
      $region12: #{tpu_custom_call.1} parent=5 // pred_fallthru
        _
      %p234 = scmp.lt.s32.totalorder %s19, 4
      // Predicated region
      $region21: #{tpu_custom_call.1} parent=5 // pred_check
        %p235 = pneg %p234
      $region22: #{tpu_custom_call.1} parent=5 // pred_check_branch
        %237 = sbr.rel (%p235) target = $region24
      $region23: #{tpu_custom_call.1} parent=5 // pred_region
        // Predicated region
        $region25: #{tpu_custom_call.1} parent=23 // pred_check
          %p238 = pneg %p51
        $region26: #{tpu_custom_call.1} parent=23 // pred_check_branch
          %240 = sbr.rel (%p238) target = $region28
        $region27: #{tpu_custom_call.1} parent=23 // pred_region
          %s241 = sand.u32 %s19, 1
          %s242 = scalar_lea.sflag [#allocation4], %s241
          %s243 = sand.u32 %s41, 1
          %s244 = smul.addr %s243, 8
          %s245 = scalar_lea.vmem [#allocation3], %s244
          %s247 = ssub.s32 128, 128
          %248 = vsyncadd %s242, %s247
          %s249 = smul.addr %s26, 128
          %s250 = scalar_lea.hbm %s0, %s249
          %s252 = sshll.u32 %s245, 4
          %s253 = int_to_ptr.vmem [resolvable:$true] %s252
          %255 = dma.hbm_to_vmem [thread:$0]  %s250, 128, %s253, %s242
        $region28: #{tpu_custom_call.1} parent=23 // pred_fallthru
          _
        // Predicated region
        $region29: #{tpu_custom_call.1} parent=23 // pred_check
          %p256 = pneg %p98
        $region30: #{tpu_custom_call.1} parent=23 // pred_check_branch
          %258 = sbr.rel (%p256) target = $region32
        $region31: #{tpu_custom_call.1} parent=23 // pred_region
          %s259 = sand.u32 %s19, 1
          %s260 = scalar_lea.sflag [#allocation4], %s259
          %s261 = sand.u32 %s88, 1
          %s262 = smul.addr %s261, 128
          %s263 = scalar_lea.vmem [#allocation8], %s262
          %s265 = ssub.s32 2048, 2048
          %266 = vsyncadd %s260, %s265
          %s267 = smul.addr %s27, 16
          %s268 = smul.addr %s267, 128
          %s269 = scalar_lea.hbm %s2, %s268
          %s270 = sshll.u32 %s263, 4
          %s271 = int_to_ptr.vmem [resolvable:$true] %s270
          %276 = dma.hbm_to_vmem [thread:$0]  %s269, 2048, %s271, %s260, 128, 128, 8
        $region32: #{tpu_custom_call.1} parent=23 // pred_fallthru
          _
        // Predicated region
        $region33: #{tpu_custom_call.1} parent=23 // pred_check
          %p277 = pneg %p124
        $region34: #{tpu_custom_call.1} parent=23 // pred_check_branch
          %279 = sbr.rel (%p277) target = $region36
        $region35: #{tpu_custom_call.1} parent=23 // pred_region
          %s280 = sand.u32 %s19, 1
          %s281 = scalar_lea.sflag [#allocation4], %s280
          %s282 = sand.u32 %s114, 1
          %s283 = smul.addr %s282, 128
          %s284 = scalar_lea.vmem [#allocation9], %s283
          %s286 = ssub.s32 2048, 2048
          %287 = vsyncadd %s281, %s286
          %s288 = smul.addr %s27, 16
          %s289 = smul.addr %s288, 128
          %s290 = scalar_lea.hbm %s3, %s289
          %s291 = sshll.u32 %s284, 4
          %s292 = int_to_ptr.vmem [resolvable:$true] %s291
          %297 = dma.hbm_to_vmem [thread:$0]  %s290, 2048, %s292, %s281, 128, 128, 8
        $region36: #{tpu_custom_call.1} parent=23 // pred_fallthru
          _
        // Predicated region
        $region37: #{tpu_custom_call.1} parent=23 // pred_check
          %p298 = pneg %p150
        $region38: #{tpu_custom_call.1} parent=23 // pred_check_branch
          %300 = sbr.rel (%p298) target = $region40
        $region39: #{tpu_custom_call.1} parent=23 // pred_region
          %s301 = sand.u32 %s19, 1
          %s302 = scalar_lea.sflag [#allocation4], %s301
          %s303 = sand.u32 %s140, 1
          %s304 = smul.addr %s303, 8
          %s305 = scalar_lea.vmem [#allocation10], %s304
          %s307 = ssub.s32 128, 128
          %308 = vsyncadd %s302, %s307
          %s309 = smul.addr %s27, 128
          %s310 = scalar_lea.hbm %s4, %s309
          %s312 = sshll.u32 %s305, 4
          %s313 = int_to_ptr.vmem [resolvable:$true] %s312
          %315 = dma.hbm_to_vmem [thread:$0]  %s310, 128, %s313, %s302
        $region40: #{tpu_custom_call.1} parent=23 // pred_fallthru
          _
      $region24: #{tpu_custom_call.1} parent=5 // pred_fallthru
        _
      %p316 = scmp.le.s32.totalorder 1, %s19
      %p317 = scmp.lt.s32.totalorder %s19, 5
      %p318 = pnand %p316, %p317
      %p319 = pneg %p318
      // Predicated region
      $region41: #{tpu_custom_call.1} parent=5 // pred_check
        _
      $region42: #{tpu_custom_call.1} parent=5 // pred_check_branch
        %321 = sbr.rel (%p318) target = $region44
      $region43: #{tpu_custom_call.1} parent=5 // pred_region
        %s322 = ssub.s32 %s19, 1
        %s323 = sand.u32 %s24, 1
        %s324 = scalar_lea.sflag [#allocation4], %s323
        %s325 = sand.u32 %s44, 1
        %s326 = smul.addr %s325, 8
        %s327 = scalar_lea.vmem [#allocation3], %s326
        // Predicated region
        $region45: #{tpu_custom_call.1} parent=43 // pred_check
          %p328 = pneg %p57
        $region46: #{tpu_custom_call.1} parent=43 // pred_check_branch
          %330 = sbr.rel (%p328) target = $region48
        $region47: #{tpu_custom_call.1} parent=43 // pred_region
          %331 = dma.done %s324, 128
        $region48: #{tpu_custom_call.1} parent=43 // pred_fallthru
          _
        // Predicated region
        $region49: #{tpu_custom_call.1} parent=43 // pred_check
          %p332 = pneg %p78
        $region50: #{tpu_custom_call.1} parent=43 // pred_check_branch
          %334 = sbr.rel (%p332) target = $region52
        $region51: #{tpu_custom_call.1} parent=43 // pred_region
          %335 = dma.done [#allocation7], 512
        $region52: #{tpu_custom_call.1} parent=43 // pred_fallthru
          _
        %s336 = sand.u32 %s24, 1
        %s337 = scalar_lea.sflag [#allocation4], %s336
        %s338 = sand.u32 %s91, 1
        %s339 = smul.addr %s338, 128
        %s340 = scalar_lea.vmem [#allocation8], %s339
        // Predicated region
        $region53: #{tpu_custom_call.1} parent=43 // pred_check
          %p341 = pneg %p104
        $region54: #{tpu_custom_call.1} parent=43 // pred_check_branch
          %343 = sbr.rel (%p341) target = $region56
        $region55: #{tpu_custom_call.1} parent=43 // pred_region
          %344 = dma.done %s337, 2048
        $region56: #{tpu_custom_call.1} parent=43 // pred_fallthru
          _
        %s345 = sand.u32 %s24, 1
        %s346 = scalar_lea.sflag [#allocation4], %s345
        %s347 = sand.u32 %s117, 1
        %s348 = smul.addr %s347, 128
        %s349 = scalar_lea.vmem [#allocation9], %s348
        // Predicated region
        $region57: #{tpu_custom_call.1} parent=43 // pred_check
          %p350 = pneg %p130
        $region58: #{tpu_custom_call.1} parent=43 // pred_check_branch
          %352 = sbr.rel (%p350) target = $region60
        $region59: #{tpu_custom_call.1} parent=43 // pred_region
          %353 = dma.done %s346, 2048
        $region60: #{tpu_custom_call.1} parent=43 // pred_fallthru
          _
        %s354 = sand.u32 %s24, 1
        %s355 = scalar_lea.sflag [#allocation4], %s354
        %s356 = sand.u32 %s143, 1
        %s357 = smul.addr %s356, 8
        %s358 = scalar_lea.vmem [#allocation10], %s357
        // Predicated region
        $region61: #{tpu_custom_call.1} parent=43 // pred_check
          %p359 = pneg %p156
        $region62: #{tpu_custom_call.1} parent=43 // pred_check_branch
          %361 = sbr.rel (%p359) target = $region64
        $region63: #{tpu_custom_call.1} parent=43 // pred_region
          %362 = dma.done %s355, 128
        $region64: #{tpu_custom_call.1} parent=43 // pred_fallthru
          _
        %s363 = sand.u32 %s24, 1
        %s364 = scalar_lea.sflag [#allocation4], %s363
        %s365 = sand.u32 %s44, 1
        %s366 = smul.addr %s365, 8
        %s367 = scalar_lea.vmem [#allocation3], %s366
        %p368 = pneg %p57
        %p369 = pneg %p54
        %p370 = pneg %p78
        %p371 = pneg %p75
        %s372 = sand.u32 %s24, 1
        %s373 = scalar_lea.sflag [#allocation4], %s372
        %s374 = sand.u32 %s91, 1
        %s375 = smul.addr %s374, 128
        %s376 = scalar_lea.vmem [#allocation8], %s375
        %p377 = pneg %p104
        %p378 = pneg %p101
        %s379 = sand.u32 %s24, 1
        %s380 = scalar_lea.sflag [#allocation4], %s379
        %s381 = sand.u32 %s117, 1
        %s382 = smul.addr %s381, 128
        %s383 = scalar_lea.vmem [#allocation9], %s382
        %p384 = pneg %p130
        %p385 = pneg %p127
        %s386 = sand.u32 %s24, 1
        %s387 = scalar_lea.sflag [#allocation4], %s386
        %s388 = sand.u32 %s143, 1
        %s389 = smul.addr %s388, 8
        %s390 = scalar_lea.vmem [#allocation10], %s389
        %p391 = pneg %p156
        %p392 = pneg %p153
        %p393 = pneg %p177
        %p394 = pneg %p174
        %p395 = pneg %p203
        %p396 = pneg %p200
        %s397 = sand.u32 %s190, 1
        %s398 = scalar_lea.sflag [#allocation5], %s397
        %s399 = sand.u32 %s190, 1
        %s400 = scalar_lea.vmem [#allocation11], %s399
        %p401 = scmp.eq.s32.totalorder %s29, 0
        // Predicated region
        $region65: #{tpu_custom_call.1} parent=43 // pred_check
          %p402 = pneg %p401
        $region66: #{tpu_custom_call.1} parent=43 // pred_check_branch
          %404 = sbr.rel (%p402) target = $region68
        $region67: #{tpu_custom_call.1} parent=43 // pred_region
          %v405 = vld [vmem:[%s327] sm:$0xff]
          %v406 = vld [vmem:[#allocation6] sm:$0xff]
          %v407 = vld [vmem:[#allocation6 + $0x8] sm:$0xff]
          %v408 = vld [vmem:[#allocation6 + $0x10] sm:$0xff]
          %v409 = vld [vmem:[#allocation6 + $0x18] sm:$0xff]
          %v410 = vld [vmem:[%s5] sm:$0x1]
          %v411 = vlaneseq
          %v412 = vshrl.u32 %v411, 7
          %v413 = vsub.s32 0, %v412
          %v414 = vrot.slane %v410, %v413
          %vm415 = vcmask 261120
          %v417 = vsel %vm415, %v405, 0
          %419 = vmatprep.subr.mxu0 0.0
          %420 = vmatpush1.msra.mxu0 %v406
          %421 = vmatprep.subr.mxu0 0.0
          %422 = vmatpush1.msra.mxu0 %v407
          %423 = vmatprep.subr.mxu0 0.0
          %424 = vmatpush1.msra.mxu0 %v408
          %425 = vmatprep.subr.mxu0 0.0
          %426 = vmatpush1.msra.mxu0 %v409
          %427 = vmatprep.subr.mxu0 0.0
          %428 = vmatpush1.msra.mxu0 0.0
          %429 = vmatprep.subr.mxu0 0.0
          %430 = vmatpush1.msra.mxu0 0.0
          %431 = vmatprep.subr.mxu0 0.0
          %432 = vmatpush1.msra.mxu0 0.0
          %433 = vmatprep.subr.mxu0 0.0
          %434 = vmatpush1.msra.mxu0 0.0
          %435 = vmatprep.subr.mxu0 0.0
          %436 = vmatpush1.msra.mxu0 0.0
          %437 = vmatprep.subr.mxu0 0.0
          %438 = vmatpush1.msra.mxu0 0.0
          %439 = vmatprep.subr.mxu0 0.0
          %440 = vmatpush1.msra.mxu0 0.0
          %441 = vmatprep.subr.mxu0 0.0
          %442 = vmatpush1.msra.mxu0 0.0
          %443 = vmatprep.subr.mxu0 0.0
          %444 = vmatpush1.msra.mxu0 0.0
          %445 = vmatprep.subr.mxu0 0.0
          %446 = vmatpush1.msra.mxu0 0.0
          %447 = vmatprep.subr.mxu0 0.0
          %448 = vmatpush1.msra.mxu0 0.0
          %449 = vmatprep.subr.mxu0 0.0
          %450 = vmatpush1.msra.mxu0 0.0
          %451 = vmatprep.subr.mxu0 0.0
          %452 = vmatpush1.msra.mxu0 0.0
          %453 = vmatprep.subr.mxu0 0.0
          %454 = vmatpush1.msra.mxu0 0.0
          %455 = vmatprep.subr.mxu0 0.0
          %456 = vmatpush1.msra.mxu0 0.0
          %457 = vmatprep.subr.mxu0 0.0
          %458 = vmatpush1.msra.mxu0 0.0
          %459 = vmatprep.subr.mxu0 0.0
          %460 = vmatpush1.msra.mxu0 0.0
          %461 = vmatprep.subr.mxu0 0.0
          %462 = vmatpush1.msra.mxu0 0.0
          %463 = vmatprep.subr.mxu0 0.0
          %464 = vmatpush1.msra.mxu0 0.0
          %465 = vmatprep.subr.mxu0 0.0
          %466 = vmatpush1.msra.mxu0 0.0
          %467 = vmatprep.subr.mxu0 0.0
          %468 = vmatpush1.msra.mxu0 0.0
          %469 = vmatprep.subr.mxu0 0.0
          %470 = vmatpush1.msra.mxu0 0.0
          %471 = vmatprep.subr.mxu0 0.0
          %472 = vmatpush1.msra.mxu0 0.0
          %473 = vmatprep.subr.mxu0 0.0
          %474 = vmatpush1.msra.mxu0 0.0
          %475 = vmatprep.subr.mxu0 0.0
          %476 = vmatpush1.msra.mxu0 0.0
          %477 = vmatprep.subr.mxu0 0.0
          %478 = vmatpush1.msra.mxu0 0.0
          %479 = vmatprep.subr.mxu0 0.0
          %480 = vmatpush1.msra.mxu0 0.0
          %481 = vmatprep.subr.mxu0 0.0
          %482 = vmatpush1.msra.mxu0 0.0
          %483 = vmatprep.mubr.f32.mxu0 0.0
          %484 = vmatmul.mubr.f32.gmra.mrb[0].mxu0 %v417
          %v485 = vpop.f32.mrb[0].mxu0
          %v486 = vadd.f32 %v414, %v485
          %v487 = vpop.f32.mrb[0].mxu0
          %488 = vdwg.mxu0
          %489 = vst [vmem:[#allocation2] sm:$0xff] %v486
        $region68: #{tpu_custom_call.1} parent=43 // pred_fallthru
          _
        %v490 = vld [vmem:[#allocation2] sm:$0xff]
        %v491 = vld [vmem:[%s358] sm:$0xff]
        %v492 = vld [vmem:[%s340] sm:$0xff]
        %v493 = vld [vmem:[%s340 + $0x8] sm:$0xff]
        %v494 = vld [vmem:[%s340 + $0x10] sm:$0xff]
        %v495 = vld [vmem:[%s340 + $0x18] sm:$0xff]
        %v496 = vld [vmem:[%s340 + $0x20] sm:$0xff]
        %v497 = vld [vmem:[%s340 + $0x28] sm:$0xff]
        %v498 = vld [vmem:[%s340 + $0x30] sm:$0xff]
        %v499 = vld [vmem:[%s340 + $0x38] sm:$0xff]
        %v500 = vld [vmem:[%s340 + $0x40] sm:$0xff]
        %v501 = vld [vmem:[%s340 + $0x48] sm:$0xff]
        %v502 = vld [vmem:[%s340 + $0x50] sm:$0xff]
        %v503 = vld [vmem:[%s340 + $0x58] sm:$0xff]
        %v504 = vld [vmem:[%s340 + $0x60] sm:$0xff]
        %v505 = vld [vmem:[%s340 + $0x68] sm:$0xff]
        %v506 = vld [vmem:[%s340 + $0x70] sm:$0xff]
        %v507 = vld [vmem:[%s340 + $0x78] sm:$0xff]
        %v508 = vlaneseq
        %v509 = vshrl.u32 %v508, 7
        %v510 = vsub.s32 0, %v509
        %v511 = vrot.slane %v491, %v510
        %512 = vmatprep.subr.mxu0 0.0
        %513 = vmatpush1.msra.mxu0 %v492
        %514 = vmatprep.subr.mxu0 0.0
        %515 = vmatpush1.msra.mxu0 %v493
        %516 = vmatprep.subr.mxu0 0.0
        %517 = vmatpush1.msra.mxu0 %v494
        %518 = vmatprep.subr.mxu0 0.0
        %519 = vmatpush1.msra.mxu0 %v495
        %520 = vmatprep.subr.mxu0 0.0
        %521 = vmatpush1.msra.mxu0 %v496
        %522 = vmatprep.subr.mxu0 0.0
        %523 = vmatpush1.msra.mxu0 %v497
        %524 = vmatprep.subr.mxu0 0.0
        %525 = vmatpush1.msra.mxu0 %v498
        %526 = vmatprep.subr.mxu0 0.0
        %527 = vmatpush1.msra.mxu0 %v499
        %528 = vmatprep.subr.mxu0 0.0
        %529 = vmatpush1.msra.mxu0 %v500
        %530 = vmatprep.subr.mxu0 0.0
        %531 = vmatpush1.msra.mxu0 %v501
        %532 = vmatprep.subr.mxu0 0.0
        %533 = vmatpush1.msra.mxu0 %v502
        %534 = vmatprep.subr.mxu0 0.0
        %535 = vmatpush1.msra.mxu0 %v503
        %536 = vmatprep.subr.mxu0 0.0
        %537 = vmatpush1.msra.mxu0 %v504
        %538 = vmatprep.subr.mxu0 0.0
        %539 = vmatpush1.msra.mxu0 %v505
        %540 = vmatprep.subr.mxu0 0.0
        %541 = vmatpush1.msra.mxu0 %v506
        %542 = vmatprep.subr.mxu0 0.0
        %543 = vmatpush1.msra.mxu0 %v507
        %544 = vmatprep.subr.mxu0 0.0
        %545 = vmatpush1.msra.mxu0 0.0
        %546 = vmatprep.subr.mxu0 0.0
        %547 = vmatpush1.msra.mxu0 0.0
        %548 = vmatprep.subr.mxu0 0.0
        %549 = vmatpush1.msra.mxu0 0.0
        %550 = vmatprep.subr.mxu0 0.0
        %551 = vmatpush1.msra.mxu0 0.0
        %552 = vmatprep.subr.mxu0 0.0
        %553 = vmatpush1.msra.mxu0 0.0
        %554 = vmatprep.subr.mxu0 0.0
        %555 = vmatpush1.msra.mxu0 0.0
        %556 = vmatprep.subr.mxu0 0.0
        %557 = vmatpush1.msra.mxu0 0.0
        %558 = vmatprep.subr.mxu0 0.0
        %559 = vmatpush1.msra.mxu0 0.0
        %560 = vmatprep.subr.mxu0 0.0
        %561 = vmatpush1.msra.mxu0 0.0
        %562 = vmatprep.subr.mxu0 0.0
        %563 = vmatpush1.msra.mxu0 0.0
        %564 = vmatprep.subr.mxu0 0.0
        %565 = vmatpush1.msra.mxu0 0.0
        %566 = vmatprep.subr.mxu0 0.0
        %567 = vmatpush1.msra.mxu0 0.0
        %568 = vmatprep.subr.mxu0 0.0
        %569 = vmatpush1.msra.mxu0 0.0
        %570 = vmatprep.subr.mxu0 0.0
        %571 = vmatpush1.msra.mxu0 0.0
        %572 = vmatprep.subr.mxu0 0.0
        %573 = vmatpush1.msra.mxu0 0.0
        %574 = vmatprep.subr.mxu0 0.0
        %575 = vmatpush1.msra.mxu0 0.0
        %576 = vmatprep.mubr.f32.mxu0 0.0
        %577 = vmatmul.mubr.f32.gmra.mrb[0].mxu0 %v490
        %v578 = vpop.f32.mrb[0].mxu0
        %v579 = vadd.f32 %v511, %v578
        %v580 = vpop.f32.mrb[0].mxu0
        %581 = vdwg.mxu0
        %582 = vadd.xlane.f32.xlu0 %v579
        %v583 = vpop.xlane.xlu0 %582
        %v584 = vrcp.pop 128.0
        %v585 = vmul.f32 %v583, %v584
        %v586 = vsub.f32 %v579, %v585
        %v587 = vmul.f32 %v586, %v586
        %588 = vadd.xlane.f32.xlu0 %v587
        %v589 = vpop.xlane.xlu0 %588
        %v590 = vmul.f32 %v589, %v584
        %v591 = vadd.f32 %v590, 1e-05
        %v592 = vrsqrt.pop %v591
        %v593 = vmul.f32 %v586, %v592
        %v594 = vlaneseq
        %v595 = vshrl.u32 %v594, 7
        %v596 = vsub.s32 1, %v595
        %v597 = vrot.slane %v491, %v596
        %v598 = vmul.f32 %v593, %v597
        %v599 = vlaneseq
        %v600 = vshrl.u32 %v599, 7
        %v601 = vsub.s32 2, %v600
        %v602 = vrot.slane %v491, %v601
        %v603 = vadd.f32 %v598, %v602
        %v604 = vmul.f32 %v603, 0.5
        %v605 = vrcp.pop 1.4142135
        %v606 = vmul.f32 %v603, %v605
        %v607 = verf.f32.pop %v606
        %v608 = vadd.f32 %v607, 1.0
        %v609 = vmul.f32 %v604, %v608
        %v610 = vld [vmem:[%s349] sm:$0xff]
        %v611 = vld [vmem:[%s349 + $0x8] sm:$0xff]
        %v612 = vld [vmem:[%s349 + $0x10] sm:$0xff]
        %v613 = vld [vmem:[%s349 + $0x18] sm:$0xff]
        %v614 = vld [vmem:[%s349 + $0x20] sm:$0xff]
        %v615 = vld [vmem:[%s349 + $0x28] sm:$0xff]
        %v616 = vld [vmem:[%s349 + $0x30] sm:$0xff]
        %v617 = vld [vmem:[%s349 + $0x38] sm:$0xff]
        %v618 = vld [vmem:[%s349 + $0x40] sm:$0xff]
        %v619 = vld [vmem:[%s349 + $0x48] sm:$0xff]
        %v620 = vld [vmem:[%s349 + $0x50] sm:$0xff]
        %v621 = vld [vmem:[%s349 + $0x58] sm:$0xff]
        %v622 = vld [vmem:[%s349 + $0x60] sm:$0xff]
        %v623 = vld [vmem:[%s349 + $0x68] sm:$0xff]
        %v624 = vld [vmem:[%s349 + $0x70] sm:$0xff]
        %v625 = vld [vmem:[%s349 + $0x78] sm:$0xff]
        %v626 = vlaneseq
        %v627 = vshrl.u32 %v626, 7
        %v628 = vsub.s32 3, %v627
        %v629 = vrot.slane %v491, %v628
        %630 = vmatprep.subr.mxu0 0.0
        %631 = vmatpush1.msra.mxu0 %v610
        %632 = vmatprep.subr.mxu0 0.0
        %633 = vmatpush1.msra.mxu0 %v611
        %634 = vmatprep.subr.mxu0 0.0
        %635 = vmatpush1.msra.mxu0 %v612
        %636 = vmatprep.subr.mxu0 0.0
        %637 = vmatpush1.msra.mxu0 %v613
        %638 = vmatprep.subr.mxu0 0.0
        %639 = vmatpush1.msra.mxu0 %v614
        %640 = vmatprep.subr.mxu0 0.0
        %641 = vmatpush1.msra.mxu0 %v615
        %642 = vmatprep.subr.mxu0 0.0
        %643 = vmatpush1.msra.mxu0 %v616
        %644 = vmatprep.subr.mxu0 0.0
        %645 = vmatpush1.msra.mxu0 %v617
        %646 = vmatprep.subr.mxu0 0.0
        %647 = vmatpush1.msra.mxu0 %v618
        %648 = vmatprep.subr.mxu0 0.0
        %649 = vmatpush1.msra.mxu0 %v619
        %650 = vmatprep.subr.mxu0 0.0
        %651 = vmatpush1.msra.mxu0 %v620
        %652 = vmatprep.subr.mxu0 0.0
        %653 = vmatpush1.msra.mxu0 %v621
        %654 = vmatprep.subr.mxu0 0.0
        %655 = vmatpush1.msra.mxu0 %v622
        %656 = vmatprep.subr.mxu0 0.0
        %657 = vmatpush1.msra.mxu0 %v623
        %658 = vmatprep.subr.mxu0 0.0
        %659 = vmatpush1.msra.mxu0 %v624
        %660 = vmatprep.subr.mxu0 0.0
        %661 = vmatpush1.msra.mxu0 %v625
        %662 = vmatprep.subr.mxu0 0.0
        %663 = vmatpush1.msra.mxu0 0.0
        %664 = vmatprep.subr.mxu0 0.0
        %665 = vmatpush1.msra.mxu0 0.0
        %666 = vmatprep.subr.mxu0 0.0
        %667 = vmatpush1.msra.mxu0 0.0
        %668 = vmatprep.subr.mxu0 0.0
        %669 = vmatpush1.msra.mxu0 0.0
        %670 = vmatprep.subr.mxu0 0.0
        %671 = vmatpush1.msra.mxu0 0.0
        %672 = vmatprep.subr.mxu0 0.0
        %673 = vmatpush1.msra.mxu0 0.0
        %674 = vmatprep.subr.mxu0 0.0
        %675 = vmatpush1.msra.mxu0 0.0
        %676 = vmatprep.subr.mxu0 0.0
        %677 = vmatpush1.msra.mxu0 0.0
        %678 = vmatprep.subr.mxu0 0.0
        %679 = vmatpush1.msra.mxu0 0.0
        %680 = vmatprep.subr.mxu0 0.0
        %681 = vmatpush1.msra.mxu0 0.0
        %682 = vmatprep.subr.mxu0 0.0
        %683 = vmatpush1.msra.mxu0 0.0
        %684 = vmatprep.subr.mxu0 0.0
        %685 = vmatpush1.msra.mxu0 0.0
        %686 = vmatprep.subr.mxu0 0.0
        %687 = vmatpush1.msra.mxu0 0.0
        %688 = vmatprep.subr.mxu0 0.0
        %689 = vmatpush1.msra.mxu0 0.0
        %690 = vmatprep.subr.mxu0 0.0
        %691 = vmatpush1.msra.mxu0 0.0
        %692 = vmatprep.subr.mxu0 0.0
        %693 = vmatpush1.msra.mxu0 0.0
        %694 = vmatprep.mubr.f32.mxu0 0.0
        %695 = vmatmul.mubr.f32.gmra.mrb[0].mxu0 %v609
        %v696 = vpop.f32.mrb[0].mxu0
        %v697 = vadd.f32 %v629, %v696
        %v698 = vpop.f32.mrb[0].mxu0
        %699 = vdwg.mxu0
        %v700 = vadd.f32 %v697, %v490
        %701 = vadd.xlane.f32.xlu0 %v700
        %v702 = vpop.xlane.xlu0 %701
        %v703 = vmul.f32 %v702, %v584
        %v704 = vsub.f32 %v700, %v703
        %v705 = vmul.f32 %v704, %v704
        %706 = vadd.xlane.f32.xlu0 %v705
        %v707 = vpop.xlane.xlu0 %706
        %v708 = vmul.f32 %v707, %v584
        %v709 = vadd.f32 %v708, 1e-05
        %v710 = vrsqrt.pop %v709
        %v711 = vmul.f32 %v704, %v710
        %v712 = vlaneseq
        %v713 = vshrl.u32 %v712, 7
        %v714 = vsub.s32 4, %v713
        %v715 = vrot.slane %v491, %v714
        %v716 = vmul.f32 %v711, %v715
        %v717 = vlaneseq
        %v718 = vshrl.u32 %v717, 7
        %v719 = vsub.s32 5, %v718
        %v720 = vrot.slane %v491, %v719
        %v721 = vadd.f32 %v716, %v720
        %v722 = vmul.f32 %v721, 0.5
        %v723 = vmul.f32 %v721, %v605
        %v724 = verf.f32.pop %v723
        %v725 = vadd.f32 %v724, 1.0
        %v726 = vmul.f32 %v722, %v725
        %727 = vst [vmem:[#allocation2] sm:$0xff] %v726
        %p728 = scmp.eq.s32.totalorder %s29, 1
        // Predicated region
        $region69: #{tpu_custom_call.1} parent=43 // pred_check
          %p729 = pneg %p728
        $region70: #{tpu_custom_call.1} parent=43 // pred_check_branch
          %731 = sbr.rel (%p729) target = $region72
        $region71: #{tpu_custom_call.1} parent=43 // pred_region
          %v732 = vld [vmem:[%s5 + $0x1] sm:$0x1]
          %v733 = vld [vmem:[%s5 + $0x2] sm:$0x1]
          %735 = vset.pattern.permute.xlu0 0
          %736 = vperm.xlu0 %735, %v733
          %v737 = vpop.permute.xlu0 %736
          %739 = vmatprep.subr.mxu0 0.0
          %740 = vmatpush1.xpose.msra.mxu0 %v726
          %741 = vmatprep.subr.mxu0 0.0
          %742 = vmatpush1.xpose.msra.mxu0 0.0
          %743 = vmatprep.subr.mxu0 0.0
          %744 = vmatpush1.xpose.msra.mxu0 0.0
          %745 = vmatprep.subr.mxu0 0.0
          %746 = vmatpush1.xpose.msra.mxu0 0.0
          %747 = vmatprep.subr.mxu0 0.0
          %748 = vmatpush1.xpose.msra.mxu0 0.0
          %749 = vmatprep.subr.mxu0 0.0
          %750 = vmatpush1.xpose.msra.mxu0 0.0
          %751 = vmatprep.subr.mxu0 0.0
          %752 = vmatpush1.xpose.msra.mxu0 0.0
          %753 = vmatprep.subr.mxu0 0.0
          %754 = vmatpush1.xpose.msra.mxu0 0.0
          %755 = vmatprep.subr.mxu0 0.0
          %756 = vmatpush1.xpose.msra.mxu0 0.0
          %757 = vmatprep.subr.mxu0 0.0
          %758 = vmatpush1.xpose.msra.mxu0 0.0
          %759 = vmatprep.subr.mxu0 0.0
          %760 = vmatpush1.xpose.msra.mxu0 0.0
          %761 = vmatprep.subr.mxu0 0.0
          %762 = vmatpush1.xpose.msra.mxu0 0.0
          %763 = vmatprep.subr.mxu0 0.0
          %764 = vmatpush1.xpose.msra.mxu0 0.0
          %765 = vmatprep.subr.mxu0 0.0
          %766 = vmatpush1.xpose.msra.mxu0 0.0
          %767 = vmatprep.subr.mxu0 0.0
          %768 = vmatpush1.xpose.msra.mxu0 0.0
          %769 = vmatprep.subr.mxu0 0.0
          %770 = vmatpush1.xpose.msra.mxu0 0.0
          %771 = vmatprep.subr.mxu0 0.0
          %772 = vmatpush1.xpose.msra.mxu0 0.0
          %773 = vmatprep.subr.mxu0 0.0
          %774 = vmatpush1.xpose.msra.mxu0 0.0
          %775 = vmatprep.subr.mxu0 0.0
          %776 = vmatpush1.xpose.msra.mxu0 0.0
          %777 = vmatprep.subr.mxu0 0.0
          %778 = vmatpush1.xpose.msra.mxu0 0.0
          %779 = vmatprep.subr.mxu0 0.0
          %780 = vmatpush1.xpose.msra.mxu0 0.0
          %781 = vmatprep.subr.mxu0 0.0
          %782 = vmatpush1.xpose.msra.mxu0 0.0
          %783 = vmatprep.subr.mxu0 0.0
          %784 = vmatpush1.xpose.msra.mxu0 0.0
          %785 = vmatprep.subr.mxu0 0.0
          %786 = vmatpush1.xpose.msra.mxu0 0.0
          %787 = vmatprep.subr.mxu0 0.0
          %788 = vmatpush1.xpose.msra.mxu0 0.0
          %789 = vmatprep.subr.mxu0 0.0
          %790 = vmatpush1.xpose.msra.mxu0 0.0
          %791 = vmatprep.subr.mxu0 0.0
          %792 = vmatpush1.xpose.msra.mxu0 0.0
          %793 = vmatprep.subr.mxu0 0.0
          %794 = vmatpush1.xpose.msra.mxu0 0.0
          %795 = vmatprep.subr.mxu0 0.0
          %796 = vmatpush1.xpose.msra.mxu0 0.0
          %797 = vmatprep.subr.mxu0 0.0
          %798 = vmatpush1.xpose.msra.mxu0 0.0
          %799 = vmatprep.subr.mxu0 0.0
          %800 = vmatpush1.xpose.msra.mxu0 0.0
          %801 = vmatprep.subr.mxu0 0.0
          %802 = vmatpush1.xpose.msra.mxu0 0.0
          %803 = vmatprep.mubr.f32.mxu0 0.0
          %804 = vmatmul.mubr.f32.gmra.mrb[0].mxu0 %v732
          %v805 = vpop.f32.mrb[0].mxu0
          %v806 = vadd.f32 %v737, %v805
          %v807 = vpop.f32.mrb[0].mxu0
          %808 = vdwg.mxu0
          %vm809 = vcmask 57344
          %810 = vst.msk [vmem:[%s400] sm:$0x1] %vm809, %v806
        $region72: #{tpu_custom_call.1} parent=43 // pred_fallthru
          _
        %s811 = sand.u32 %s190, 1
        %s812 = scalar_lea.sflag [#allocation5], %s811
        %s813 = sand.u32 %s190, 1
        %s814 = scalar_lea.vmem [#allocation11], %s813
        // Predicated region
        $region73: #{tpu_custom_call.1} parent=43 // pred_check
          %p815 = pneg %p200
        $region74: #{tpu_custom_call.1} parent=43 // pred_check_branch
          %817 = sbr.rel (%p815) target = $region76
        $region75: #{tpu_custom_call.1} parent=43 // pred_region
          %s819 = ssub.s32 16, 16
          %820 = vsyncadd %s812, %s819
          %s821 = smul.addr %s28, 16
          %s822 = scalar_lea.hbm %s6, %s821
          %s824 = sshll.u32 %s814, 4
          %s825 = int_to_ptr.vmem [resolvable:$true] %s824
          %827 = dma.vmem_to_hbm [thread:$0]  %s825, 16, %s822, %s812
        $region76: #{tpu_custom_call.1} parent=43 // pred_fallthru
          _
      $region44: #{tpu_custom_call.1} parent=5 // pred_fallthru
        _
      %p828 = scmp.le.s32.totalorder 2, %s19
      // Predicated region
      $region77: #{tpu_custom_call.1} parent=5 // pred_check
        %p829 = pneg %p828
      $region78: #{tpu_custom_call.1} parent=5 // pred_check_branch
        %831 = sbr.rel (%p829) target = $region80
      $region79: #{tpu_custom_call.1} parent=5 // pred_region
        %s832 = ssub.s32 %s19, 2
        // Predicated region
        $region81: #{tpu_custom_call.1} parent=79 // pred_check
          %p833 = pneg %p206
        $region82: #{tpu_custom_call.1} parent=79 // pred_check_branch
          %835 = sbr.rel (%p833) target = $region84
        $region83: #{tpu_custom_call.1} parent=79 // pred_region
          %s836 = sand.u32 %s191, 1
          %s837 = scalar_lea.sflag [#allocation5], %s836
          %s838 = sand.u32 %s191, 1
          %s839 = scalar_lea.vmem [#allocation11], %s838
          %840 = dma.done %s837, 16
        $region84: #{tpu_custom_call.1} parent=79 // pred_fallthru
          _
      $region80: #{tpu_custom_call.1} parent=5 // pred_fallthru
        _
    $region6: #{tpu_custom_call.1} parent=1 // loop_footer
      %s23 = sadd.s32 1, %s19
    $region7: #{tpu_custom_call.1} parent=1 // loop_footer_branch
      %18 = sbr.rel target = $region3
    $region8: #{tpu_custom_call.1} parent=1 // loop_exit
      _
    %841 = vsyncpa [#allocation4], 1
    %s842 = scalar_lea.sflag [#allocation4], 1
    %843 = vsyncpa %s842, 1
    %844 = vsyncpa [#allocation7], 1
    %845 = vsyncpa [#allocation5], 1
    %s846 = scalar_lea.sflag [#allocation5], 1
    %847 = vsyncpa %s846, 1

</llo_original>
